<compile_context>
chip_gen: v7x
topology: tpu7x:2x2x1
jax: 0.10.0
libtpu: 0.0.40
codegen_flags: <defaults>
</compile_context>

<pallas_src>
import functools

import numpy as np
import jax
import jax.numpy as jnp
from jax import lax
from jax.experimental import pallas as pl
from jax.experimental.pallas import tpu as pltpu

EPS = 1e-5  # torch nn.LayerNorm default eps


# ----------------------------------------------------------------------------
# In-kernel math helpers
# ----------------------------------------------------------------------------
def _gelu(x, approx_rcp):
    # Exact (erf-form) GELU matching torch.nn.GELU() default.
    # Abramowitz & Stegun 7.1.26 polynomial erf, |err| < 1.5e-7.
    # exp() runs on the EUP; with approx_rcp the divide also moves to the EUP
    # (vrcp) instead of a VALU divide sequence.
    a1, a2, a3, a4, a5 = 0.254829592, -0.284496736, 1.421413741, -1.453152027, 1.061405429
    p = 0.3275911
    xr = x * 0.7071067811865476
    ax = jnp.abs(xr)
    t = pl.reciprocal(1.0 + p * ax, approx=approx_rcp)
    poly = t * (a1 + t * (a2 + t * (a3 + t * (a4 + t * a5))))
    erf = 1.0 - poly * jnp.exp(-ax * ax)
    erf = jnp.where(xr >= 0.0, erf, -erf)
    return 0.5 * x * (1.0 + erf)


# ----------------------------------------------------------------------------
# Fused ConvNorm kernel: conv-as-matmul + bias + channel LayerNorm + GELU
# ----------------------------------------------------------------------------
def _conv_norm_kernel(k_ref, w_ref, b_ref, lnw_ref, lnb_ref, o_ref, *,
                      act, approx_rcp):
    # k_ref  : (K, TILE)     im2col patches, lanes = flattened batch*spatial
    # w_ref  : (Cout, K)     conv weight, K ordered (cin, dy, dx)
    # b_ref  : (Cout, 1)     conv bias (f32)
    # lnw_ref: (Cout, 1)     LayerNorm weight (f32)
    # lnb_ref: (Cout, 1)     LayerNorm bias (f32)
    # o_ref  : (Cout, TILE)  output tile — lane-dense, full Cout resident
    y = jnp.dot(w_ref[...], k_ref[...], preferred_element_type=jnp.float32)
    y = y + b_ref[...]                                         # (Cout, TILE)

    # Channel LayerNorm per spatial position (lane), single-pass moments.
    mu = jnp.mean(y, axis=0, keepdims=True)                    # (1, TILE)
    ms = jnp.mean(y * y, axis=0, keepdims=True)                # (1, TILE)
    var = jnp.maximum(ms - mu * mu, 0.0)                       # biased var (torch)
    rstd = lax.rsqrt(var + EPS)                                # EUP
    scale = lnw_ref[...] * rstd                                # (Cout, TILE)
    out = (y - mu) * scale + lnb_ref[...]

    if act:
        out = _gelu(out, approx_rcp)

    o_ref[...] = out.astype(o_ref.dtype)


# ----------------------------------------------------------------------------
# Wrapper helpers
# ----------------------------------------------------------------------------
def _im2col_kn(x, kh, kw, stride, padding):
    """(B, Cin, H, W) -> (Cin*kh*kw, B*Ho*Wo).

    Row (K) ordering is (cin, dy, dx) to match conv_w.reshape(Cout, K);
    column (N) ordering is (b, ho, wo).  Pure layout plumbing (XLA fusion).
    """
    B, Cin, H, W = x.shape
    if padding:
        x = jnp.pad(x, ((0, 0), (0, 0), (padding, padding), (padding, padding)))
    Hp, Wp = H + 2 * padding, W + 2 * padding
    Ho = (Hp - kh) // stride + 1
    Wo = (Wp - kw) // stride + 1
    taps = []
    for dy in range(kh):
        for dx in range(kw):
            taps.append(x[:, :, dy:dy + (Ho - 1) * stride + 1:stride,
                             dx:dx + (Wo - 1) * stride + 1:stride])
    k = jnp.stack(taps, axis=2)                 # (B, Cin, T, Ho, Wo)
    k = k.transpose(1, 2, 0, 3, 4)              # (Cin, T, B, Ho, Wo)
    return k.reshape(Cin * kh * kw, B * Ho * Wo), Ho, Wo


def _pick_lane_tile(K, Cout, n_total, in_itemsize, out_itemsize,
                    vmem_budget_bytes=8 << 20):
    """Largest lane tile (multiple of 128, <=2048) whose double-buffered
    per-step working set fits a conservative VMEM budget (safe on v7x)."""
    # 2x-buffered input+output tiles per lane, plus ~6 f32 full-size temps.
    per_lane = 2 * (K * in_itemsize + Cout * out_itemsize) + 6 * 4 * Cout
    max_tile = max(128, int(vmem_budget_bytes // max(per_lane, 1)))
    tile = min(2048, max_tile, pl.cdiv(n_total, 128) * 128)
    return max(128, (tile // 128) * 128)


# ----------------------------------------------------------------------------
# Fused ConvNorm forward
# ----------------------------------------------------------------------------
def conv_norm(x, params, *, kernel=1, stride=1, padding=0, act=True,
              matmul_dtype=jnp.bfloat16, out_dtype=jnp.float32):
    """Fused ConvNorm forward.  x is NCHW (like the torch module); returns NCHW.

    matmul_dtype: dtype of the MXU operands (conv inputs + weights).  bf16 is
      an accuracy knob (operand quantization); float32 gives exact parity with
      the PyTorch module.  Accumulation / LN / GELU are always f32 in-kernel.
    out_dtype: HBM writeback dtype (bf16 halves output bytes if downstream ok).
    """
    B, Cin_x, H, W = x.shape
    Cout, Cin, kh, kw = params["conv_w"].shape
    assert Cin_x == Cin and kh == kw == kernel

    # Cast BEFORE im2col: the kh*kw-amplified patches array is built directly
    # in the narrow matmul dtype (one HBM pass, half the bytes for bf16).
    xm = x.astype(matmul_dtype)
    patches, Ho, Wo = _im2col_kn(xm, kh, kw, stride, padding)   # (K, B*HW)
    K = Cin * kh * kw
    HW = Ho * Wo
    N = B * HW

    # Lane tile over the flattened batch*spatial axis (multiple of 128 so all
    # stores are unmasked / lane-dense), padded up if needed.
    tile = _pick_lane_tile(K, Cout, N,
                           np.dtype(matmul_dtype).itemsize,
                           np.dtype(out_dtype).itemsize)
    n_pad = pl.cdiv(N, tile) * tile
    if n_pad != N:
        patches = jnp.pad(patches, ((0, 0), (0, n_pad - N)))

    w_mat = params["conv_w"].reshape(Cout, K).astype(matmul_dtype)
    b = params["conv_b"].reshape(Cout, 1).astype(jnp.float32)
    lnw = params["ln_w"].reshape(Cout, 1).astype(jnp.float32)
    lnb = params["ln_b"].reshape(Cout, 1).astype(jnp.float32)

    approx_rcp = np.dtype(matmul_dtype) != np.dtype(jnp.float32)
    kern = functools.partial(_conv_norm_kernel, act=act, approx_rcp=approx_rcp)

    out = pl.pallas_call(
        kern,
        out_shape=jax.ShapeDtypeStruct((Cout, n_pad), out_dtype),
        grid=(n_pad // tile,),
        in_specs=[
            pl.BlockSpec((K, tile), lambda n: (0, n)),       # patches tile
            pl.BlockSpec((Cout, K), lambda n: (0, 0)),       # conv weight
            pl.BlockSpec((Cout, 1), lambda n: (0, 0)),       # conv bias
            pl.BlockSpec((Cout, 1), lambda n: (0, 0)),       # LN weight
            pl.BlockSpec((Cout, 1), lambda n: (0, 0)),       # LN bias
        ],
        out_specs=pl.BlockSpec((Cout, tile), lambda n: (0, n)),
        compiler_params=pltpu.CompilerParams(
            dimension_semantics=("parallel",)),              # megacore split
    )(patches, w_mat, b, lnw, lnb)

    # Drop lane padding and rearrange (Cout, B*HW) -> NCHW.  The channel<->batch
    # swap is a small XLA block-copy (contiguous HW-sized chunks), negligible
    # next to the kernel's streams.
    out = out[:, :N].reshape(Cout, B, HW).transpose(1, 0, 2)
    return out.reshape(B, Cout, Ho, Wo)


# ----------------------------------------------------------------------------
# Params + pure-JAX reference (for a correctness check in __main__)
# ----------------------------------------------------------------------------
def init_conv_norm_params(key, inplanes, outplanes, kernel, affine=True):
    k1, k2, k3, k4 = jax.random.split(key, 4)
    bound = 1.0 / np.sqrt(inplanes * kernel * kernel)
    p = {
        "conv_w": jax.random.uniform(k1, (outplanes, inplanes, kernel, kernel),
                                     jnp.float32, -bound, bound),
        "conv_b": jax.random.uniform(k2, (outplanes,), jnp.float32, -bound, bound),
    }
    if affine:
        # torch initializes LN to (1, 0); perturb so the affine path is exercised.
        p["ln_w"] = 1.0 + 0.1 * jax.random.normal(k3, (outplanes,), jnp.float32)
        p["ln_b"] = 0.1 * jax.random.normal(k4, (outplanes,), jnp.float32)
    else:
        p["ln_w"] = jnp.ones((outplanes,), jnp.float32)
        p["ln_b"] = jnp.zeros((outplanes,), jnp.float32)
    return p


def reference_conv_norm(x, params, *, kernel=1, stride=1, padding=0, act=True):
    """Pure-JAX (XLA) reference matching the torch ConvNorm forward."""
    y = lax.conv_general_dilated(
        x, params["conv_w"], window_strides=(stride, stride),
        padding=[(padding, padding), (padding, padding)],
        dimension_numbers=("NCHW", "OIHW", "NCHW"))
    y = y + params["conv_b"].reshape(1, -1, 1, 1)
    mu = jnp.mean(y, axis=1, keepdims=True)
    var = jnp.mean((y - mu) ** 2, axis=1, keepdims=True)
    out = (y - mu) / jnp.sqrt(var + EPS)
    out = out * params["ln_w"].reshape(1, -1, 1, 1) + params["ln_b"].reshape(1, -1, 1, 1)
    return jax.nn.gelu(out, approximate=False) if act else out


if __name__ == "__main__":
    key = jax.random.PRNGKey(0)
    kx, kp1, kp2 = jax.random.split(key, 3)

    # NCHW input like the PyTorch module: batch=2, channels=4, 16x16 spatial.
    x = jax.random.normal(kx, (2, 4, 16, 16), jnp.float32)

    # ConvNorm(4, 32, kernel=3, stride=1, padding=1, act=True)
    p1 = init_conv_norm_params(kp1, inplanes=4, outplanes=32, kernel=3)

    # Fast path: bf16 MXU operands + bf16 writeback (accuracy knob).
    out_fast = conv_norm(x, p1, kernel=3, stride=1, padding=1, act=True,
                         matmul_dtype=jnp.bfloat16, out_dtype=jnp.bfloat16)
    out_fast = jax.block_until_ready(out_fast)
    assert out_fast.shape == (2, 32, 16, 16), out_fast.shape
    out_fast_f32 = out_fast.astype(jnp.float32)
    assert bool(jnp.all(jnp.isfinite(out_fast_f32)))

    # f32-parity path vs XLA reference.
    ref1 = reference_conv_norm(x, p1, kernel=3, stride=1, padding=1, act=True)
    out_f32 = conv_norm(x, p1, kernel=3, stride=1, padding=1, act=True,
                        matmul_dtype=jnp.float32, out_dtype=jnp.float32)
    assert bool(jnp.allclose(out_f32, ref1, atol=1e-4, rtol=1e-4))
    assert bool(jnp.allclose(out_fast_f32, ref1, atol=1e-1, rtol=1e-1))  # bf16 path

    # ConvNorm(4, 8, kernel=1, stride=1, padding=0, act=False)
    p2 = init_conv_norm_params(kp2, inplanes=4, outplanes=8, kernel=1)
    out2 = conv_norm(x, p2, kernel=1, stride=1, padding=0, act=False,
                     matmul_dtype=jnp.float32, out_dtype=jnp.float32)
    ref2 = reference_conv_norm(x, p2, kernel=1, stride=1, padding=0, act=False)
    assert out2.shape == (2, 8, 16, 16), out2.shape
    assert bool(jnp.allclose(out2, ref2, atol=1e-4, rtol=1e-4))

    print("KERNEL_OK")
</pallas_src>

<mosaic_0001>
module attributes {stable_mosaic.version = 11 : i64} {
  func.func @_conv_norm_kernel(%arg0: i32, %arg1: memref<36x512xbf16, #tpu.memory_space<vmem>>, %arg2: memref<32x36xbf16, #tpu.memory_space<vmem>>, %arg3: memref<32x1xf32, #tpu.memory_space<vmem>>, %arg4: memref<32x1xf32, #tpu.memory_space<vmem>>, %arg5: memref<32x1xf32, #tpu.memory_space<vmem>>, %arg6: memref<32x512xbf16, #tpu.memory_space<vmem>>) attributes {dimension_semantics = [#tpu.dimension_semantics<parallel>], iteration_bounds = array<i64: 1>, scalar_prefetch = 0 : i64, scratch_operands = 0 : i64, tpu.core_type = #tpu.core_type<tc>, window_params = [{transform_indices = @transform_0, window_bounds = array<i64: 36, 512>}, {pipeline_mode = #tpu.pipeline_mode<synchronous>, transform_indices = @transform_1, window_bounds = array<i64: 32, 36>}, {pipeline_mode = #tpu.pipeline_mode<synchronous>, transform_indices = @transform_2, window_bounds = array<i64: 32, 1>}, {pipeline_mode = #tpu.pipeline_mode<synchronous>, transform_indices = @transform_3, window_bounds = array<i64: 32, 1>}, {pipeline_mode = #tpu.pipeline_mode<synchronous>, transform_indices = @transform_4, window_bounds = array<i64: 32, 1>}, {transform_indices = @transform_5, window_bounds = array<i64: 32, 512>}]} {
    %c0 = arith.constant 0 : index
    %c0_0 = arith.constant 0 : index
    %0 = vector.load %arg2[%c0, %c0_0] : memref<32x36xbf16, #tpu.memory_space<vmem>>, vector<32x36xbf16>
    %c0_1 = arith.constant 0 : index
    %c0_2 = arith.constant 0 : index
    %1 = vector.load %arg1[%c0_1, %c0_2] : memref<36x512xbf16, #tpu.memory_space<vmem>>, vector<36x512xbf16>
    %cst = arith.constant dense<0.000000e+00> : vector<32x512xf32>
    %2 = tpu.matmul %0, %1, %cst {dimension_numbers = #tpu.dot_dimension_numbers<[1], [0], [0], [1], [0, 0, 1, 1], [], []>} : vector<32x36xbf16>, vector<36x512xbf16>, vector<32x512xf32> -> vector<32x512xf32>
    %c0_3 = arith.constant 0 : index
    %c0_4 = arith.constant 0 : index
    %3 = vector.load %arg3[%c0_3, %c0_4] : memref<32x1xf32, #tpu.memory_space<vmem>>, vector<32x1xf32>
    %4 = vector.broadcast %3 : vector<32x1xf32> to vector<32x512xf32>
    %5 = arith.addf %2, %4 : vector<32x512xf32>
    %cst_5 = arith.constant dense<0.000000e+00> : vector<512xf32>
    %6 = vector.multi_reduction <add>, %5, %cst_5 [0] : vector<32x512xf32> to vector<512xf32>
    %7 = vector.shape_cast %6 : vector<512xf32> to vector<1x512xf32>
    %cst_6 = arith.constant 3.200000e+01 : f32
    %8 = vector.broadcast %cst_6 : f32 to vector<1x512xf32>
    %9 = arith.divf %7, %8 : vector<1x512xf32>
    %10 = arith.mulf %5, %5 : vector<32x512xf32>
    %cst_7 = arith.constant dense<0.000000e+00> : vector<512xf32>
    %11 = vector.multi_reduction <add>, %10, %cst_7 [0] : vector<32x512xf32> to vector<512xf32>
    %12 = vector.shape_cast %11 : vector<512xf32> to vector<1x512xf32>
    %cst_8 = arith.constant 3.200000e+01 : f32
    %13 = vector.broadcast %cst_8 : f32 to vector<1x512xf32>
    %14 = arith.divf %12, %13 : vector<1x512xf32>
    %15 = arith.mulf %9, %9 : vector<1x512xf32>
    %16 = arith.subf %14, %15 : vector<1x512xf32>
    %cst_9 = arith.constant 0.000000e+00 : f32
    %17 = vector.broadcast %cst_9 : f32 to vector<1x512xf32>
    %18 = arith.maximumf %16, %17 : vector<1x512xf32>
    %cst_10 = arith.constant 9.99999974E-6 : f32
    %19 = vector.broadcast %cst_10 : f32 to vector<1x512xf32>
    %20 = arith.addf %18, %19 : vector<1x512xf32>
    %21 = math.rsqrt %20 : vector<1x512xf32>
    %c0_11 = arith.constant 0 : index
    %c0_12 = arith.constant 0 : index
    %22 = vector.load %arg4[%c0_11, %c0_12] : memref<32x1xf32, #tpu.memory_space<vmem>>, vector<32x1xf32>
    %23 = vector.broadcast %22 : vector<32x1xf32> to vector<32x512xf32>
    %24 = vector.broadcast %21 : vector<1x512xf32> to vector<32x512xf32>
    %25 = arith.mulf %23, %24 : vector<32x512xf32>
    %26 = vector.broadcast %9 : vector<1x512xf32> to vector<32x512xf32>
    %27 = arith.subf %5, %26 : vector<32x512xf32>
    %28 = arith.mulf %27, %25 : vector<32x512xf32>
    %c0_13 = arith.constant 0 : index
    %c0_14 = arith.constant 0 : index
    %29 = vector.load %arg5[%c0_13, %c0_14] : memref<32x1xf32, #tpu.memory_space<vmem>>, vector<32x1xf32>
    %30 = vector.broadcast %29 : vector<32x1xf32> to vector<32x512xf32>
    %31 = arith.addf %28, %30 : vector<32x512xf32>
    %cst_15 = arith.constant 0.707106769 : f32
    %32 = vector.broadcast %cst_15 : f32 to vector<32x512xf32>
    %33 = arith.mulf %31, %32 : vector<32x512xf32>
    %34 = math.absf %33 : vector<32x512xf32>
    %cst_16 = arith.constant 0.327591091 : f32
    %35 = vector.broadcast %cst_16 : f32 to vector<32x512xf32>
    %36 = arith.mulf %35, %34 : vector<32x512xf32>
    %cst_17 = arith.constant 1.000000e+00 : f32
    %37 = vector.broadcast %cst_17 : f32 to vector<32x512xf32>
    %38 = arith.addf %37, %36 : vector<32x512xf32>
    %39 = tpu.reciprocal %38 {approx = true} : vector<32x512xf32> -> vector<32x512xf32>
    %cst_18 = arith.constant 1.06140542 : f32
    %40 = vector.broadcast %cst_18 : f32 to vector<32x512xf32>
    %41 = arith.mulf %39, %40 : vector<32x512xf32>
    %cst_19 = arith.constant -1.45315206 : f32
    %42 = vector.broadcast %cst_19 : f32 to vector<32x512xf32>
    %43 = arith.addf %42, %41 : vector<32x512xf32>
    %44 = arith.mulf %39, %43 : vector<32x512xf32>
    %cst_20 = arith.constant 1.42141378 : f32
    %45 = vector.broadcast %cst_20 : f32 to vector<32x512xf32>
    %46 = arith.addf %45, %44 : vector<32x512xf32>
    %47 = arith.mulf %39, %46 : vector<32x512xf32>
    %cst_21 = arith.constant -0.284496725 : f32
    %48 = vector.broadcast %cst_21 : f32 to vector<32x512xf32>
    %49 = arith.addf %48, %47 : vector<32x512xf32>
    %50 = arith.mulf %39, %49 : vector<32x512xf32>
    %cst_22 = arith.constant 0.254829586 : f32
    %51 = vector.broadcast %cst_22 : f32 to vector<32x512xf32>
    %52 = arith.addf %51, %50 : vector<32x512xf32>
    %53 = arith.mulf %39, %52 : vector<32x512xf32>
    %cst_23 = arith.constant 0.000000e+00 : f32
    %54 = vector.broadcast %cst_23 : f32 to vector<32x512xf32>
    %55 = arith.subf %54, %34 : vector<32x512xf32>
    %56 = arith.mulf %55, %34 : vector<32x512xf32>
    %57 = math.exp %56 : vector<32x512xf32>
    %58 = arith.mulf %53, %57 : vector<32x512xf32>
    %cst_24 = arith.constant 1.000000e+00 : f32
    %59 = vector.broadcast %cst_24 : f32 to vector<32x512xf32>
    %60 = arith.subf %59, %58 : vector<32x512xf32>
    %cst_25 = arith.constant 0.000000e+00 : f32
    %61 = vector.broadcast %cst_25 : f32 to vector<32x512xf32>
    %62 = arith.cmpf oge, %33, %61 : vector<32x512xf32>
    %cst_26 = arith.constant 0.000000e+00 : f32
    %63 = vector.broadcast %cst_26 : f32 to vector<32x512xf32>
    %64 = arith.subf %63, %60 : vector<32x512xf32>
    %65 = arith.select %62, %60, %64 : vector<32x512xi1>, vector<32x512xf32>
    %cst_27 = arith.constant 5.000000e-01 : f32
    %66 = vector.broadcast %cst_27 : f32 to vector<32x512xf32>
    %67 = arith.mulf %66, %31 : vector<32x512xf32>
    %cst_28 = arith.constant 1.000000e+00 : f32
    %68 = vector.broadcast %cst_28 : f32 to vector<32x512xf32>
    %69 = arith.addf %68, %65 : vector<32x512xf32>
    %70 = arith.mulf %67, %69 : vector<32x512xf32>
    %71 = arith.truncf %70 : vector<32x512xf32> to vector<32x512xbf16>
    %c0_29 = arith.constant 0 : index
    %c0_30 = arith.constant 0 : index
    %72 = vector.load %arg6[%c0_29, %c0_30] : memref<32x512xbf16, #tpu.memory_space<vmem>>, vector<32x512xbf16>
    tpu.vector_store %arg6[%c0_29, %c0_30], %71 {strides = array<i32>} : memref<32x512xbf16, #tpu.memory_space<vmem>>, vector<32x512xbf16>,
    return
  }
  func.func @transform_0(%arg0: i32) -> (i32, i32) {
    %c0_i32 = arith.constant 0 : i32
    %c0_i32_0 = arith.constant 0 : i32
    return %c0_i32, %arg0 : i32, i32
  }
  func.func @transform_1(%arg0: i32) -> (i32, i32) {
    %c0_i32 = arith.constant 0 : i32
    %c0_i32_0 = arith.constant 0 : i32
    %c0_i32_1 = arith.constant 0 : i32
    return %c0_i32, %c0_i32_0 : i32, i32
  }
  func.func @transform_2(%arg0: i32) -> (i32, i32) {
    %c0_i32 = arith.constant 0 : i32
    %c0_i32_0 = arith.constant 0 : i32
    %c0_i32_1 = arith.constant 0 : i32
    return %c0_i32, %c0_i32_0 : i32, i32
  }
  func.func @transform_3(%arg0: i32) -> (i32, i32) {
    %c0_i32 = arith.constant 0 : i32
    %c0_i32_0 = arith.constant 0 : i32
    %c0_i32_1 = arith.constant 0 : i32
    return %c0_i32, %c0_i32_0 : i32, i32
  }
  func.func @transform_4(%arg0: i32) -> (i32, i32) {
    %c0_i32 = arith.constant 0 : i32
    %c0_i32_0 = arith.constant 0 : i32
    %c0_i32_1 = arith.constant 0 : i32
    return %c0_i32, %c0_i32_0 : i32, i32
  }
  func.func @transform_5(%arg0: i32) -> (i32, i32) {
    %c0_i32 = arith.constant 0 : i32
    %c0_i32_0 = arith.constant 0 : i32
    return %c0_i32, %arg0 : i32, i32
  }
}

</mosaic_0001>

<llo_original>
// kernel: tpu_custom_call.1
$region0: #{tpu_custom_call.1}
  #allocation0 [shape = 'u32[]', space=smem, size = 0x4, offset = 0x4, fixed_abs, tag = 'smem constant byte address 0x4 - core index']
  #allocation1 [shape = 'u32[144,128]{1,0:T(1,128)}', space=vmem, size = 0x12000, scoped, tag = 'internal scratch']
  %s0 = inlined_call_operand.vmem [shape: bf16[36,512], index: 0, kind: input, shape index: {}]
  %s1 = inlined_call_operand.vmem [shape: bf16[32,36], index: 1, kind: input, shape index: {}]
  %s2 = inlined_call_operand.vmem [shape: f32[32,1], index: 2, kind: input, shape index: {}]
  %s3 = inlined_call_operand.vmem [shape: f32[32,1], index: 3, kind: input, shape index: {}]
  %s4 = inlined_call_operand.vmem [shape: f32[32,1], index: 4, kind: input, shape index: {}]
  %s5 = inlined_call_operand.hbm [shape: bf16[32,512], index: 5, kind: output, shape index: {}]
  %s6 = sld [smem:[#allocation0]]
  $region30: #{tpu_custom_call.1} parent=0
    _
  %s8 = ssub.s32 1, %s6
  %s9 = scalar_select 0, %s8, %s6
  $region1: #{tpu_custom_call.1} parent=0
    #allocation2 [shape = 'u8[32768]{0}', space=vmem, size = 0x8000, scoped, tag = 'output window, operand 0, single buffered']
    #allocation3 [shape = 's32[1]{0}', space=sflag, size = 0x4, scoped, tag = 'scoped memory for tpu_custom_call.1']
    %10 = vsyncpa [#allocation3], 0
    // Predicated region
    $region2: #{tpu_custom_call.1} parent=1 // pred_check
      _
    $region3: #{tpu_custom_call.1} parent=1 // pred_check_branch
      %12 = sbr.rel (0) target = $region5
    $region4: #{tpu_custom_call.1} parent=1 // pred_region
      _
    $region5: #{tpu_custom_call.1} parent=1 // pred_fallthru
      _
    // Predicated region
    $region6: #{tpu_custom_call.1} parent=1 // pred_check
      _
    $region7: #{tpu_custom_call.1} parent=1 // pred_check_branch
      %14 = sbr.rel (0) target = $region9
    $region8: #{tpu_custom_call.1} parent=1 // pred_region
      _
    $region9: #{tpu_custom_call.1} parent=1 // pred_fallthru
      _
    // Predicated region
    $region10: #{tpu_custom_call.1} parent=1 // pred_check
      _
    $region11: #{tpu_custom_call.1} parent=1 // pred_check_branch
      %16 = sbr.rel (0) target = $region13
    $region12: #{tpu_custom_call.1} parent=1 // pred_region
      _
    $region13: #{tpu_custom_call.1} parent=1 // pred_fallthru
      _
    // Predicated region
    $region14: #{tpu_custom_call.1} parent=1 // pred_check
      _
    $region15: #{tpu_custom_call.1} parent=1 // pred_check_branch
      %18 = sbr.rel (0) target = $region17
    $region16: #{tpu_custom_call.1} parent=1 // pred_region
      _
    $region17: #{tpu_custom_call.1} parent=1 // pred_fallthru
      _
    // Predicated region
    $region18: #{tpu_custom_call.1} parent=1 // pred_check
      _
    $region19: #{tpu_custom_call.1} parent=1 // pred_check_branch
      %20 = sbr.rel (0) target = $region21
    $region20: #{tpu_custom_call.1} parent=1 // pred_region
      _
    $region21: #{tpu_custom_call.1} parent=1 // pred_fallthru
      _
    %v22 = vld [vmem:[%s1] sm:$0xf]
    %v23 = vld [vmem:[%s1 + $0x4] sm:$0xf]
    %v24 = vld [vmem:[%s1 + $0x8] sm:$0xf]
    %v25 = vld [vmem:[%s1 + $0xc] sm:$0xf]
    %v26 = vld [vmem:[%s0] sm:$0xff]
    %v27 = vld [vmem:[%s0 + $0x8] sm:$0xff]
    %v28 = vld [vmem:[%s0 + $0x10] sm:$0xff]
    %v29 = vld [vmem:[%s0 + $0x18] sm:$0xff]
    %v30 = vld [vmem:[%s0 + $0x20] sm:$0xff]
    %v31 = vld [vmem:[%s0 + $0x28] sm:$0xff]
    %v32 = vld [vmem:[%s0 + $0x30] sm:$0xff]
    %v33 = vld [vmem:[%s0 + $0x38] sm:$0xff]
    %v34 = vld [vmem:[%s0 + $0x40] sm:$0x33]
    %v35 = vld [vmem:[%s0 + $0x48] sm:$0x33]
    %v36 = vld [vmem:[%s2] sm:$0xff]
    %v37 = vld [vmem:[%s2 + $0x8] sm:$0xff]
    %v38 = vld [vmem:[%s2 + $0x10] sm:$0xff]
    %v39 = vld [vmem:[%s2 + $0x18] sm:$0xff]
    %41 = vset.pattern.permute.xlu0 0
    %42 = vperm.xlu0 %41, %v36
    %v43 = vpop.permute.xlu0 %42
    %46 = vset.pattern.permute.xlu0 0
    %47 = vperm.xlu0 %46, %v37
    %v48 = vpop.permute.xlu0 %47
    %51 = vset.pattern.permute.xlu0 0
    %52 = vperm.xlu0 %51, %v38
    %v53 = vpop.permute.xlu0 %52
    %56 = vset.pattern.permute.xlu0 0
    %57 = vperm.xlu0 %56, %v39
    %v58 = vpop.permute.xlu0 %57
    %v64 = vunpack.c.l.b16 %v22
    %v65 = vunpack.c.l.b16 %v23
    %v66 = vunpack.c.l.b16 %v24
    %v67 = vunpack.c.l.b16 %v25
    %v68 = vpack.c.b16 %v65, %v64
    %v69 = vpack.c.b16 %v67, %v66
    %v80 = vunpack.c.l.b16 %v26
    %v81 = vunpack.c.h.b16 %v26
    %v82 = vunpack.c.l.b16 %v27
    %v83 = vunpack.c.h.b16 %v27
    %v84 = vunpack.c.l.b16 %v28
    %v85 = vunpack.c.h.b16 %v28
    %v86 = vunpack.c.l.b16 %v29
    %v87 = vunpack.c.h.b16 %v29
    %v88 = vunpack.c.l.b16 %v30
    %v89 = vunpack.c.h.b16 %v30
    %v90 = vunpack.c.l.b16 %v31
    %v91 = vunpack.c.h.b16 %v31
    %v92 = vunpack.c.l.b16 %v32
    %v93 = vunpack.c.h.b16 %v32
    %v94 = vunpack.c.l.b16 %v33
    %v95 = vunpack.c.h.b16 %v33
    %v96 = vunpack.c.l.b16 %v34
    %v97 = vunpack.c.h.b16 %v34
    %v98 = vunpack.c.l.b16 %v35
    %v99 = vunpack.c.h.b16 %v35
    %v100 = vpack.c.b16 %v84, %v80
    %v101 = vpack.c.b16 %v85, %v81
    %v102 = vpack.c.b16 %v86, %v82
    %v103 = vpack.c.b16 %v87, %v83
    %v104 = vpack.c.b16 %v92, %v88
    %v105 = vpack.c.b16 %v93, %v89
    %v106 = vpack.c.b16 %v94, %v90
    %v107 = vpack.c.b16 %v95, %v91
    %v108 = vpack.c.b16 %v96, %v96
    %v109 = vpack.c.b16 %v97, %v97
    %v110 = vpack.c.b16 %v98, %v98
    %v111 = vpack.c.b16 %v99, %v99
    %vm120 = vcmask 293888
    %v122 = vsel %vm120, %v68, 0
    %v125 = vsel %vm120, %v69, 0
    %vm127 = vcmask 1041408
    %v129 = vsel %vm127, %v108, 0
    %v132 = vsel %vm127, %v109, 0
    %v135 = vsel %vm127, %v110, 0
    %v138 = vsel %vm127, %v111, 0
    %140 = vmatprep.subr.bf16.mxu0 %v101
    %141 = vmatpush1.bf16.msra.mxu0 %v100
    %142 = vmatprep.subr.bf16.mxu0 %v105
    %143 = vmatpush1.bf16.msra.mxu0 %v104
    %144 = vmatprep.subr.bf16.mxu0 %v132
    %145 = vmatpush1.bf16.msra.mxu0 %v129
    %146 = vmatprep.subr.bf16.mxu0 0
    %147 = vmatpush1.bf16.msra.mxu0 0
    %148 = vmatprep.subr.bf16.mxu0 0
    %149 = vmatpush1.bf16.msra.mxu0 0
    %150 = vmatprep.subr.bf16.mxu0 0
    %151 = vmatpush1.bf16.msra.mxu0 0
    %152 = vmatprep.subr.bf16.mxu0 0
    %153 = vmatpush1.bf16.msra.mxu0 0
    %154 = vmatprep.subr.bf16.mxu0 0
    %155 = vmatpush1.bf16.msra.mxu0 0
    %156 = vmatprep.subr.bf16.mxu0 0
    %157 = vmatpush1.bf16.msra.mxu0 0
    %158 = vmatprep.subr.bf16.mxu0 0
    %159 = vmatpush1.bf16.msra.mxu0 0
    %160 = vmatprep.subr.bf16.mxu0 0
    %161 = vmatpush1.bf16.msra.mxu0 0
    %162 = vmatprep.subr.bf16.mxu0 0
    %163 = vmatpush1.bf16.msra.mxu0 0
    %164 = vmatprep.subr.bf16.mxu0 0
    %165 = vmatpush1.bf16.msra.mxu0 0
    %166 = vmatprep.subr.bf16.mxu0 0
    %167 = vmatpush1.bf16.msra.mxu0 0
    %168 = vmatprep.subr.bf16.mxu0 0
    %169 = vmatpush1.bf16.msra.mxu0 0
    %170 = vmatprep.subr.bf16.mxu0 0
    %171 = vmatpush1.bf16.msra.mxu0 0
    %172 = vmatprep.mubr.bf16.mxu0 0
    %173 = vmatmul.mubr.bf16.gmra.mrb[0].mxu0 %v122
    %v174 = vpop.f32.mrb[0].mxu0
    %v175 = vadd.f32 %v43, %v174
    %v176 = vpop.f32.mrb[0].mxu0
    %v177 = vadd.f32 %v43, %v176
    %v178 = vpop.f32.mrb[0].mxu0
    %v179 = vadd.f32 %v48, %v178
    %v180 = vpop.f32.mrb[0].mxu0
    %v181 = vadd.f32 %v48, %v180
    %182 = vmatprep.mubr.bf16.mxu0 0
    %183 = vmatmul.mubr.bf16.gmra.mrb[0].mxu0 %v125
    %v184 = vpop.f32.mrb[0].mxu0
    %v185 = vadd.f32 %v53, %v184
    %v186 = vpop.f32.mrb[0].mxu0
    %v187 = vadd.f32 %v53, %v186
    %v188 = vpop.f32.mrb[0].mxu0
    %v189 = vadd.f32 %v58, %v188
    %v190 = vpop.f32.mrb[0].mxu0
    %v191 = vadd.f32 %v58, %v190
    %192 = vdwg.mxu0
    %193 = vmatprep.subr.bf16.mxu0 %v103
    %194 = vmatpush1.bf16.msra.mxu0 %v102
    %195 = vmatprep.subr.bf16.mxu0 %v107
    %196 = vmatpush1.bf16.msra.mxu0 %v106
    %197 = vmatprep.subr.bf16.mxu0 %v138
    %198 = vmatpush1.bf16.msra.mxu0 %v135
    %199 = vmatprep.subr.bf16.mxu0 0
    %200 = vmatpush1.bf16.msra.mxu0 0
    %201 = vmatprep.subr.bf16.mxu0 0
    %202 = vmatpush1.bf16.msra.mxu0 0
    %203 = vmatprep.subr.bf16.mxu0 0
    %204 = vmatpush1.bf16.msra.mxu0 0
    %205 = vmatprep.subr.bf16.mxu0 0
    %206 = vmatpush1.bf16.msra.mxu0 0
    %207 = vmatprep.subr.bf16.mxu0 0
    %208 = vmatpush1.bf16.msra.mxu0 0
    %209 = vmatprep.subr.bf16.mxu0 0
    %210 = vmatpush1.bf16.msra.mxu0 0
    %211 = vmatprep.subr.bf16.mxu0 0
    %212 = vmatpush1.bf16.msra.mxu0 0
    %213 = vmatprep.subr.bf16.mxu0 0
    %214 = vmatpush1.bf16.msra.mxu0 0
    %215 = vmatprep.subr.bf16.mxu0 0
    %216 = vmatpush1.bf16.msra.mxu0 0
    %217 = vmatprep.subr.bf16.mxu0 0
    %218 = vmatpush1.bf16.msra.mxu0 0
    %219 = vmatprep.subr.bf16.mxu0 0
    %220 = vmatpush1.bf16.msra.mxu0 0
    %221 = vmatprep.subr.bf16.mxu0 0
    %222 = vmatpush1.bf16.msra.mxu0 0
    %223 = vmatprep.subr.bf16.mxu0 0
    %224 = vmatpush1.bf16.msra.mxu0 0
    %225 = vmatprep.mubr.bf16.mxu0 0
    %226 = vmatmul.mubr.bf16.gmra.mrb[0].mxu0 %v122
    %v227 = vpop.f32.mrb[0].mxu0
    %v228 = vadd.f32 %v43, %v227
    %v229 = vpop.f32.mrb[0].mxu0
    %v230 = vadd.f32 %v43, %v229
    %v231 = vpop.f32.mrb[0].mxu0
    %v232 = vadd.f32 %v48, %v231
    %v233 = vpop.f32.mrb[0].mxu0
    %v234 = vadd.f32 %v48, %v233
    %235 = vmatprep.mubr.bf16.mxu0 0
    %236 = vmatmul.mubr.bf16.gmra.mrb[0].mxu0 %v125
    %v237 = vpop.f32.mrb[0].mxu0
    %v238 = vadd.f32 %v53, %v237
    %v239 = vpop.f32.mrb[0].mxu0
    %v240 = vadd.f32 %v53, %v239
    %v241 = vpop.f32.mrb[0].mxu0
    %v242 = vadd.f32 %v58, %v241
    %v243 = vpop.f32.mrb[0].mxu0
    %v244 = vadd.f32 %v58, %v243
    %245 = vdwg.mxu0
    %v246 = vadd.f32 %v175, %v179
    %v247 = vadd.f32 %v246, %v185
    %v248 = vadd.f32 %v247, %v189
    %v249 = vrot.slane %v248, 4
    %v250 = vadd.f32 %v248, %v249
    %v251 = vrot.slane %v250, 2
    %v252 = vadd.f32 %v250, %v251
    %v253 = vrot.slane %v252, 1
    %v254 = vadd.f32 %v252, %v253
    %v255 = vadd.f32 %v177, %v181
    %v256 = vadd.f32 %v255, %v187
    %v257 = vadd.f32 %v256, %v191
    %v258 = vrot.slane %v257, 4
    %v259 = vadd.f32 %v257, %v258
    %v260 = vrot.slane %v259, 2
    %v261 = vadd.f32 %v259, %v260
    %v262 = vrot.slane %v261, 1
    %v263 = vadd.f32 %v261, %v262
    %v264 = vadd.f32 %v228, %v232
    %v265 = vadd.f32 %v264, %v238
    %v266 = vadd.f32 %v265, %v242
    %v267 = vrot.slane %v266, 4
    %v268 = vadd.f32 %v266, %v267
    %v269 = vrot.slane %v268, 2
    %v270 = vadd.f32 %v268, %v269
    %v271 = vrot.slane %v270, 1
    %v272 = vadd.f32 %v270, %v271
    %v273 = vadd.f32 %v230, %v234
    %v274 = vadd.f32 %v273, %v240
    %v275 = vadd.f32 %v274, %v244
    %v276 = vrot.slane %v275, 4
    %v277 = vadd.f32 %v275, %v276
    %v278 = vrot.slane %v277, 2
    %v279 = vadd.f32 %v277, %v278
    %v280 = vrot.slane %v279, 1
    %v281 = vadd.f32 %v279, %v280
    %v282 = vrcp.pop 32.0
    %v283 = vmul.f32 %v254, %v282
    %v284 = vmul.f32 %v263, %v282
    %v285 = vmul.f32 %v272, %v282
    %v286 = vmul.f32 %v281, %v282
    %v287 = vmul.f32 %v175, %v175
    %v288 = vmul.f32 %v177, %v177
    %v289 = vmul.f32 %v228, %v228
    %v290 = vmul.f32 %v230, %v230
    %v291 = vmul.f32 %v179, %v179
    %v292 = vmul.f32 %v181, %v181
    %v293 = vmul.f32 %v232, %v232
    %v294 = vmul.f32 %v234, %v234
    %v295 = vmul.f32 %v185, %v185
    %v296 = vmul.f32 %v187, %v187
    %v297 = vmul.f32 %v238, %v238
    %v298 = vmul.f32 %v240, %v240
    %v299 = vmul.f32 %v189, %v189
    %v300 = vmul.f32 %v191, %v191
    %v301 = vmul.f32 %v242, %v242
    %v302 = vmul.f32 %v244, %v244
    %v303 = vadd.f32 %v287, %v291
    %v304 = vadd.f32 %v303, %v295
    %v305 = vadd.f32 %v304, %v299
    %v306 = vrot.slane %v305, 4
    %v307 = vadd.f32 %v305, %v306
    %v308 = vrot.slane %v307, 2
    %v309 = vadd.f32 %v307, %v308
    %v310 = vrot.slane %v309, 1
    %v311 = vadd.f32 %v309, %v310
    %v312 = vadd.f32 %v288, %v292
    %v313 = vadd.f32 %v312, %v296
    %v314 = vadd.f32 %v313, %v300
    %v315 = vrot.slane %v314, 4
    %v316 = vadd.f32 %v314, %v315
    %v317 = vrot.slane %v316, 2
    %v318 = vadd.f32 %v316, %v317
    %v319 = vrot.slane %v318, 1
    %v320 = vadd.f32 %v318, %v319
    %v321 = vadd.f32 %v289, %v293
    %v322 = vadd.f32 %v321, %v297
    %v323 = vadd.f32 %v322, %v301
    %v324 = vrot.slane %v323, 4
    %v325 = vadd.f32 %v323, %v324
    %v326 = vrot.slane %v325, 2
    %v327 = vadd.f32 %v325, %v326
    %v328 = vrot.slane %v327, 1
    %v329 = vadd.f32 %v327, %v328
    %v330 = vadd.f32 %v290, %v294
    %v331 = vadd.f32 %v330, %v298
    %v332 = vadd.f32 %v331, %v302
    %v333 = vrot.slane %v332, 4
    %v334 = vadd.f32 %v332, %v333
    %v335 = vrot.slane %v334, 2
    %v336 = vadd.f32 %v334, %v335
    %v337 = vrot.slane %v336, 1
    %v338 = vadd.f32 %v336, %v337
    %v339 = vmul.f32 %v311, %v282
    %v340 = vmul.f32 %v320, %v282
    %v341 = vmul.f32 %v329, %v282
    %v342 = vmul.f32 %v338, %v282
    %v343 = vmul.f32 %v283, %v283
    %v344 = vmul.f32 %v284, %v284
    %v345 = vmul.f32 %v285, %v285
    %v346 = vmul.f32 %v286, %v286
    %v347 = vsub.f32 %v339, %v343
    %v348 = vsub.f32 %v340, %v344
    %v349 = vsub.f32 %v341, %v345
    %v350 = vsub.f32 %v342, %v346
    %v351 = vmax.f32 %v347, 0.0
    %v352 = vmax.f32 %v348, 0.0
    %v353 = vmax.f32 %v349, 0.0
    %v354 = vmax.f32 %v350, 0.0
    %v355 = vadd.f32 %v351, 1e-05
    %v356 = vadd.f32 %v352, 1e-05
    %v357 = vadd.f32 %v353, 1e-05
    %v358 = vadd.f32 %v354, 1e-05
    %v359 = vrsqrt.pop %v355
    %v360 = vrsqrt.pop %v356
    %v361 = vrsqrt.pop %v357
    %v362 = vrsqrt.pop %v358
    %v363 = vld [vmem:[%s3] sm:$0xff]
    %v364 = vld [vmem:[%s3 + $0x8] sm:$0xff]
    %v365 = vld [vmem:[%s3 + $0x10] sm:$0xff]
    %v366 = vld [vmem:[%s3 + $0x18] sm:$0xff]
    %368 = vset.pattern.permute.xlu0 0
    %369 = vperm.xlu0 %368, %v363
    %v370 = vpop.permute.xlu0 %369
    %373 = vset.pattern.permute.xlu0 0
    %374 = vperm.xlu0 %373, %v364
    %v375 = vpop.permute.xlu0 %374
    %378 = vset.pattern.permute.xlu0 0
    %379 = vperm.xlu0 %378, %v365
    %v380 = vpop.permute.xlu0 %379
    %383 = vset.pattern.permute.xlu0 0
    %384 = vperm.xlu0 %383, %v366
    %v385 = vpop.permute.xlu0 %384
    %v387 = vmul.f32 %v370, %v359
    %v388 = vmul.f32 %v370, %v360
    %v389 = vmul.f32 %v370, %v361
    %v390 = vmul.f32 %v370, %v362
    %v391 = vmul.f32 %v375, %v359
    %v392 = vmul.f32 %v375, %v360
    %v393 = vmul.f32 %v375, %v361
    %v394 = vmul.f32 %v375, %v362
    %v395 = vmul.f32 %v380, %v359
    %v396 = vmul.f32 %v380, %v360
    %v397 = vmul.f32 %v380, %v361
    %v398 = vmul.f32 %v380, %v362
    %v399 = vmul.f32 %v385, %v359
    %v400 = vmul.f32 %v385, %v360
    %v401 = vmul.f32 %v385, %v361
    %v402 = vmul.f32 %v385, %v362
    %v403 = vsub.f32 %v175, %v283
    %v404 = vsub.f32 %v177, %v284
    %v405 = vsub.f32 %v228, %v285
    %v406 = vsub.f32 %v230, %v286
    %v407 = vsub.f32 %v179, %v283
    %v408 = vsub.f32 %v181, %v284
    %v409 = vsub.f32 %v232, %v285
    %v410 = vsub.f32 %v234, %v286
    %v411 = vsub.f32 %v185, %v283
    %v412 = vsub.f32 %v187, %v284
    %v413 = vsub.f32 %v238, %v285
    %v414 = vsub.f32 %v240, %v286
    %v415 = vsub.f32 %v189, %v283
    %v416 = vsub.f32 %v191, %v284
    %v417 = vsub.f32 %v242, %v285
    %v418 = vsub.f32 %v244, %v286
    %v419 = vmul.f32 %v403, %v387
    %v420 = vmul.f32 %v404, %v388
    %v421 = vmul.f32 %v405, %v389
    %v422 = vmul.f32 %v406, %v390
    %v423 = vmul.f32 %v407, %v391
    %v424 = vmul.f32 %v408, %v392
    %v425 = vmul.f32 %v409, %v393
    %v426 = vmul.f32 %v410, %v394
    %v427 = vmul.f32 %v411, %v395
    %v428 = vmul.f32 %v412, %v396
    %v429 = vmul.f32 %v413, %v397
    %v430 = vmul.f32 %v414, %v398
    %v431 = vmul.f32 %v415, %v399
    %v432 = vmul.f32 %v416, %v400
    %v433 = vmul.f32 %v417, %v401
    %v434 = vmul.f32 %v418, %v402
    %v435 = vld [vmem:[%s4] sm:$0xff]
    %v436 = vld [vmem:[%s4 + $0x8] sm:$0xff]
    %v437 = vld [vmem:[%s4 + $0x10] sm:$0xff]
    %v438 = vld [vmem:[%s4 + $0x18] sm:$0xff]
    %440 = vset.pattern.permute.xlu0 0
    %441 = vperm.xlu0 %440, %v435
    %v442 = vpop.permute.xlu0 %441
    %445 = vset.pattern.permute.xlu0 0
    %446 = vperm.xlu0 %445, %v436
    %v447 = vpop.permute.xlu0 %446
    %450 = vset.pattern.permute.xlu0 0
    %451 = vperm.xlu0 %450, %v437
    %v452 = vpop.permute.xlu0 %451
    %455 = vset.pattern.permute.xlu0 0
    %456 = vperm.xlu0 %455, %v438
    %v457 = vpop.permute.xlu0 %456
    %v459 = vadd.f32 %v419, %v442
    %v460 = vadd.f32 %v420, %v442
    %v461 = vadd.f32 %v421, %v442
    %v462 = vadd.f32 %v422, %v442
    %v463 = vadd.f32 %v423, %v447
    %v464 = vadd.f32 %v424, %v447
    %v465 = vadd.f32 %v425, %v447
    %v466 = vadd.f32 %v426, %v447
    %v467 = vadd.f32 %v427, %v452
    %v468 = vadd.f32 %v428, %v452
    %v469 = vadd.f32 %v429, %v452
    %v470 = vadd.f32 %v430, %v452
    %v471 = vadd.f32 %v431, %v457
    %v472 = vadd.f32 %v432, %v457
    %v473 = vadd.f32 %v433, %v457
    %v474 = vadd.f32 %v434, %v457
    %v475 = vmul.f32 %v459, 0.70710677
    %v476 = vmul.f32 %v460, 0.70710677
    %v477 = vmul.f32 %v461, 0.70710677
    %v478 = vmul.f32 %v462, 0.70710677
    %v479 = vmul.f32 %v463, 0.70710677
    %v480 = vmul.f32 %v464, 0.70710677
    %v481 = vmul.f32 %v465, 0.70710677
    %v482 = vmul.f32 %v466, 0.70710677
    %v483 = vmul.f32 %v467, 0.70710677
    %v484 = vmul.f32 %v468, 0.70710677
    %v485 = vmul.f32 %v469, 0.70710677
    %v486 = vmul.f32 %v470, 0.70710677
    %v487 = vmul.f32 %v471, 0.70710677
    %v488 = vmul.f32 %v472, 0.70710677
    %v489 = vmul.f32 %v473, 0.70710677
    %v490 = vmul.f32 %v474, 0.70710677
    %v491 = vand.u32 2147483647, %v475
    %v492 = vand.u32 2147483647, %v476
    %v493 = vand.u32 2147483647, %v477
    %v494 = vand.u32 2147483647, %v478
    %v495 = vand.u32 2147483647, %v479
    %v496 = vand.u32 2147483647, %v480
    %v497 = vand.u32 2147483647, %v481
    %v498 = vand.u32 2147483647, %v482
    %v499 = vand.u32 2147483647, %v483
    %v500 = vand.u32 2147483647, %v484
    %v501 = vand.u32 2147483647, %v485
    %v502 = vand.u32 2147483647, %v486
    %v503 = vand.u32 2147483647, %v487
    %v504 = vand.u32 2147483647, %v488
    %v505 = vand.u32 2147483647, %v489
    %v506 = vand.u32 2147483647, %v490
    %v507 = vmul.f32 %v491, 0.3275911
    %v508 = vmul.f32 %v492, 0.3275911
    %v509 = vmul.f32 %v493, 0.3275911
    %v510 = vmul.f32 %v494, 0.3275911
    %v511 = vmul.f32 %v495, 0.3275911
    %v512 = vmul.f32 %v496, 0.3275911
    %v513 = vmul.f32 %v497, 0.3275911
    %v514 = vmul.f32 %v498, 0.3275911
    %v515 = vmul.f32 %v499, 0.3275911
    %v516 = vmul.f32 %v500, 0.3275911
    %v517 = vmul.f32 %v501, 0.3275911
    %v518 = vmul.f32 %v502, 0.3275911
    %v519 = vmul.f32 %v503, 0.3275911
    %v520 = vmul.f32 %v504, 0.3275911
    %v521 = vmul.f32 %v505, 0.3275911
    %v522 = vmul.f32 %v506, 0.3275911
    %v523 = vadd.f32 %v507, 1.0
    %v524 = vadd.f32 %v508, 1.0
    %v525 = vadd.f32 %v509, 1.0
    %v526 = vadd.f32 %v510, 1.0
    %v527 = vadd.f32 %v511, 1.0
    %v528 = vadd.f32 %v512, 1.0
    %v529 = vadd.f32 %v513, 1.0
    %v530 = vadd.f32 %v514, 1.0
    %v531 = vadd.f32 %v515, 1.0
    %v532 = vadd.f32 %v516, 1.0
    %v533 = vadd.f32 %v517, 1.0
    %v534 = vadd.f32 %v518, 1.0
    %v535 = vadd.f32 %v519, 1.0
    %v536 = vadd.f32 %v520, 1.0
    %v537 = vadd.f32 %v521, 1.0
    %v538 = vadd.f32 %v522, 1.0
    %v539 = vrcp.pop %v523
    %v540 = vrcp.pop %v524
    %v541 = vrcp.pop %v525
    %v542 = vrcp.pop %v526
    %v543 = vrcp.pop %v527
    %v544 = vrcp.pop %v528
    %v545 = vrcp.pop %v529
    %v546 = vrcp.pop %v530
    %v547 = vrcp.pop %v531
    %v548 = vrcp.pop %v532
    %v549 = vrcp.pop %v533
    %v550 = vrcp.pop %v534
    %v551 = vrcp.pop %v535
    %v552 = vrcp.pop %v536
    %v553 = vrcp.pop %v537
    %v554 = vrcp.pop %v538
    %v555 = vmul.f32 %v539, 1.0614054
    %v556 = vmul.f32 %v540, 1.0614054
    %v557 = vmul.f32 %v541, 1.0614054
    %v558 = vmul.f32 %v542, 1.0614054
    %v559 = vmul.f32 %v543, 1.0614054
    %v560 = vmul.f32 %v544, 1.0614054
    %v561 = vmul.f32 %v545, 1.0614054
    %v562 = vmul.f32 %v546, 1.0614054
    %v563 = vmul.f32 %v547, 1.0614054
    %v564 = vmul.f32 %v548, 1.0614054
    %v565 = vmul.f32 %v549, 1.0614054
    %v566 = vmul.f32 %v550, 1.0614054
    %v567 = vmul.f32 %v551, 1.0614054
    %v568 = vmul.f32 %v552, 1.0614054
    %v569 = vmul.f32 %v553, 1.0614054
    %v570 = vmul.f32 %v554, 1.0614054
    %v571 = vadd.f32 %v555, -1.4531521
    %v572 = vadd.f32 %v556, -1.4531521
    %v573 = vadd.f32 %v557, -1.4531521
    %v574 = vadd.f32 %v558, -1.4531521
    %v575 = vadd.f32 %v559, -1.4531521
    %v576 = vadd.f32 %v560, -1.4531521
    %v577 = vadd.f32 %v561, -1.4531521
    %v578 = vadd.f32 %v562, -1.4531521
    %v579 = vadd.f32 %v563, -1.4531521
    %v580 = vadd.f32 %v564, -1.4531521
    %v581 = vadd.f32 %v565, -1.4531521
    %v582 = vadd.f32 %v566, -1.4531521
    %v583 = vadd.f32 %v567, -1.4531521
    %v584 = vadd.f32 %v568, -1.4531521
    %v585 = vadd.f32 %v569, -1.4531521
    %v586 = vadd.f32 %v570, -1.4531521
    %v587 = vmul.f32 %v539, %v571
    %v588 = vmul.f32 %v540, %v572
    %v589 = vmul.f32 %v541, %v573
    %v590 = vmul.f32 %v542, %v574
    %v591 = vmul.f32 %v543, %v575
    %v592 = vmul.f32 %v544, %v576
    %v593 = vmul.f32 %v545, %v577
    %v594 = vmul.f32 %v546, %v578
    %v595 = vmul.f32 %v547, %v579
    %v596 = vmul.f32 %v548, %v580
    %v597 = vmul.f32 %v549, %v581
    %v598 = vmul.f32 %v550, %v582
    %v599 = vmul.f32 %v551, %v583
    %v600 = vmul.f32 %v552, %v584
    %v601 = vmul.f32 %v553, %v585
    %v602 = vmul.f32 %v554, %v586
    %v603 = vadd.f32 %v587, 1.4214138
    %v604 = vadd.f32 %v588, 1.4214138
    %v605 = vadd.f32 %v589, 1.4214138
    %v606 = vadd.f32 %v590, 1.4214138
    %v607 = vadd.f32 %v591, 1.4214138
    %v608 = vadd.f32 %v592, 1.4214138
    %v609 = vadd.f32 %v593, 1.4214138
    %v610 = vadd.f32 %v594, 1.4214138
    %v611 = vadd.f32 %v595, 1.4214138
    %v612 = vadd.f32 %v596, 1.4214138
    %v613 = vadd.f32 %v597, 1.4214138
    %v614 = vadd.f32 %v598, 1.4214138
    %v615 = vadd.f32 %v599, 1.4214138
    %v616 = vadd.f32 %v600, 1.4214138
    %v617 = vadd.f32 %v601, 1.4214138
    %v618 = vadd.f32 %v602, 1.4214138
    %v619 = vmul.f32 %v539, %v603
    %v620 = vmul.f32 %v540, %v604
    %v621 = vmul.f32 %v541, %v605
    %v622 = vmul.f32 %v542, %v606
    %v623 = vmul.f32 %v543, %v607
    %v624 = vmul.f32 %v544, %v608
    %v625 = vmul.f32 %v545, %v609
    %v626 = vmul.f32 %v546, %v610
    %v627 = vmul.f32 %v547, %v611
    %v628 = vmul.f32 %v548, %v612
    %v629 = vmul.f32 %v549, %v613
    %v630 = vmul.f32 %v550, %v614
    %v631 = vmul.f32 %v551, %v615
    %v632 = vmul.f32 %v552, %v616
    %v633 = vmul.f32 %v553, %v617
    %v634 = vmul.f32 %v554, %v618
    %v635 = vadd.f32 %v619, -0.28449672
    %v636 = vadd.f32 %v620, -0.28449672
    %v637 = vadd.f32 %v621, -0.28449672
    %v638 = vadd.f32 %v622, -0.28449672
    %v639 = vadd.f32 %v623, -0.28449672
    %v640 = vadd.f32 %v624, -0.28449672
    %v641 = vadd.f32 %v625, -0.28449672
    %v642 = vadd.f32 %v626, -0.28449672
    %v643 = vadd.f32 %v627, -0.28449672
    %v644 = vadd.f32 %v628, -0.28449672
    %v645 = vadd.f32 %v629, -0.28449672
    %v646 = vadd.f32 %v630, -0.28449672
    %v647 = vadd.f32 %v631, -0.28449672
    %v648 = vadd.f32 %v632, -0.28449672
    %v649 = vadd.f32 %v633, -0.28449672
    %v650 = vadd.f32 %v634, -0.28449672
    %v651 = vmul.f32 %v539, %v635
    %v652 = vmul.f32 %v540, %v636
    %v653 = vmul.f32 %v541, %v637
    %v654 = vmul.f32 %v542, %v638
    %v655 = vmul.f32 %v543, %v639
    %v656 = vmul.f32 %v544, %v640
    %v657 = vmul.f32 %v545, %v641
    %v658 = vmul.f32 %v546, %v642
    %v659 = vmul.f32 %v547, %v643
    %v660 = vmul.f32 %v548, %v644
    %v661 = vmul.f32 %v549, %v645
    %v662 = vmul.f32 %v550, %v646
    %v663 = vmul.f32 %v551, %v647
    %v664 = vmul.f32 %v552, %v648
    %v665 = vmul.f32 %v553, %v649
    %v666 = vmul.f32 %v554, %v650
    %v667 = vadd.f32 %v651, 0.2548296
    %v668 = vadd.f32 %v652, 0.2548296
    %v669 = vadd.f32 %v653, 0.2548296
    %v670 = vadd.f32 %v654, 0.2548296
    %v671 = vadd.f32 %v655, 0.2548296
    %v672 = vadd.f32 %v656, 0.2548296
    %v673 = vadd.f32 %v657, 0.2548296
    %v674 = vadd.f32 %v658, 0.2548296
    %v675 = vadd.f32 %v659, 0.2548296
    %v676 = vadd.f32 %v660, 0.2548296
    %v677 = vadd.f32 %v661, 0.2548296
    %v678 = vadd.f32 %v662, 0.2548296
    %v679 = vadd.f32 %v663, 0.2548296
    %v680 = vadd.f32 %v664, 0.2548296
    %v681 = vadd.f32 %v665, 0.2548296
    %v682 = vadd.f32 %v666, 0.2548296
    %v683 = vmul.f32 %v539, %v667
    %v684 = vmul.f32 %v540, %v668
    %v685 = vmul.f32 %v541, %v669
    %v686 = vmul.f32 %v542, %v670
    %v687 = vmul.f32 %v543, %v671
    %v688 = vmul.f32 %v544, %v672
    %v689 = vmul.f32 %v545, %v673
    %v690 = vmul.f32 %v546, %v674
    %v691 = vmul.f32 %v547, %v675
    %v692 = vmul.f32 %v548, %v676
    %v693 = vmul.f32 %v549, %v677
    %v694 = vmul.f32 %v550, %v678
    %v695 = vmul.f32 %v551, %v679
    %v696 = vmul.f32 %v552, %v680
    %v697 = vmul.f32 %v553, %v681
    %v698 = vmul.f32 %v554, %v682
    %v699 = vsub.f32 0.0, %v491
    %v700 = vsub.f32 0.0, %v492
    %v701 = vsub.f32 0.0, %v493
    %v702 = vsub.f32 0.0, %v494
    %v703 = vsub.f32 0.0, %v495
    %v704 = vsub.f32 0.0, %v496
    %v705 = vsub.f32 0.0, %v497
    %v706 = vsub.f32 0.0, %v498
    %v707 = vsub.f32 0.0, %v499
    %v708 = vsub.f32 0.0, %v500
    %v709 = vsub.f32 0.0, %v501
    %v710 = vsub.f32 0.0, %v502
    %v711 = vsub.f32 0.0, %v503
    %v712 = vsub.f32 0.0, %v504
    %v713 = vsub.f32 0.0, %v505
    %v714 = vsub.f32 0.0, %v506
    %v715 = vmul.f32 %v699, %v491
    %v716 = vmul.f32 %v700, %v492
    %v717 = vmul.f32 %v701, %v493
    %v718 = vmul.f32 %v702, %v494
    %v719 = vmul.f32 %v703, %v495
    %v720 = vmul.f32 %v704, %v496
    %v721 = vmul.f32 %v705, %v497
    %v722 = vmul.f32 %v706, %v498
    %v723 = vmul.f32 %v707, %v499
    %v724 = vmul.f32 %v708, %v500
    %v725 = vmul.f32 %v709, %v501
    %v726 = vmul.f32 %v710, %v502
    %v727 = vmul.f32 %v711, %v503
    %v728 = vmul.f32 %v712, %v504
    %v729 = vmul.f32 %v713, %v505
    %v730 = vmul.f32 %v714, %v506
    %v731 = vmul.f32 %v715, 1.442695
    %v732 = vpow.pop %v731
    %v733 = vmul.f32 %v716, 1.442695
    %v734 = vpow.pop %v733
    %v735 = vmul.f32 %v717, 1.442695
    %v736 = vpow.pop %v735
    %v737 = vmul.f32 %v718, 1.442695
    %v738 = vpow.pop %v737
    %v739 = vmul.f32 %v719, 1.442695
    %v740 = vpow.pop %v739
    %v741 = vmul.f32 %v720, 1.442695
    %v742 = vpow.pop %v741
    %v743 = vmul.f32 %v721, 1.442695
    %v744 = vpow.pop %v743
    %v745 = vmul.f32 %v722, 1.442695
    %v746 = vpow.pop %v745
    %v747 = vmul.f32 %v723, 1.442695
    %v748 = vpow.pop %v747
    %v749 = vmul.f32 %v724, 1.442695
    %v750 = vpow.pop %v749
    %v751 = vmul.f32 %v725, 1.442695
    %v752 = vpow.pop %v751
    %v753 = vmul.f32 %v726, 1.442695
    %v754 = vpow.pop %v753
    %v755 = vmul.f32 %v727, 1.442695
    %v756 = vpow.pop %v755
    %v757 = vmul.f32 %v728, 1.442695
    %v758 = vpow.pop %v757
    %v759 = vmul.f32 %v729, 1.442695
    %v760 = vpow.pop %v759
    %v761 = vmul.f32 %v730, 1.442695
    %v762 = vpow.pop %v761
    %v763 = vmul.f32 %v683, %v732
    %v764 = vmul.f32 %v684, %v734
    %v765 = vmul.f32 %v685, %v736
    %v766 = vmul.f32 %v686, %v738
    %v767 = vmul.f32 %v687, %v740
    %v768 = vmul.f32 %v688, %v742
    %v769 = vmul.f32 %v689, %v744
    %v770 = vmul.f32 %v690, %v746
    %v771 = vmul.f32 %v691, %v748
    %v772 = vmul.f32 %v692, %v750
    %v773 = vmul.f32 %v693, %v752
    %v774 = vmul.f32 %v694, %v754
    %v775 = vmul.f32 %v695, %v756
    %v776 = vmul.f32 %v696, %v758
    %v777 = vmul.f32 %v697, %v760
    %v778 = vmul.f32 %v698, %v762
    %v779 = vsub.f32 1.0, %v763
    %v780 = vsub.f32 1.0, %v764
    %v781 = vsub.f32 1.0, %v765
    %v782 = vsub.f32 1.0, %v766
    %v783 = vsub.f32 1.0, %v767
    %v784 = vsub.f32 1.0, %v768
    %v785 = vsub.f32 1.0, %v769
    %v786 = vsub.f32 1.0, %v770
    %v787 = vsub.f32 1.0, %v771
    %v788 = vsub.f32 1.0, %v772
    %v789 = vsub.f32 1.0, %v773
    %v790 = vsub.f32 1.0, %v774
    %v791 = vsub.f32 1.0, %v775
    %v792 = vsub.f32 1.0, %v776
    %v793 = vsub.f32 1.0, %v777
    %v794 = vsub.f32 1.0, %v778
    %vm795 = vcmp.ge.f32.partialorder %v475, 0.0
    %vm796 = vcmp.ge.f32.partialorder %v476, 0.0
    %vm797 = vcmp.ge.f32.partialorder %v477, 0.0
    %vm798 = vcmp.ge.f32.partialorder %v478, 0.0
    %vm799 = vcmp.ge.f32.partialorder %v479, 0.0
    %vm800 = vcmp.ge.f32.partialorder %v480, 0.0
    %vm801 = vcmp.ge.f32.partialorder %v481, 0.0
    %vm802 = vcmp.ge.f32.partialorder %v482, 0.0
    %vm803 = vcmp.ge.f32.partialorder %v483, 0.0
    %vm804 = vcmp.ge.f32.partialorder %v484, 0.0
    %vm805 = vcmp.ge.f32.partialorder %v485, 0.0
    %vm806 = vcmp.ge.f32.partialorder %v486, 0.0
    %vm807 = vcmp.ge.f32.partialorder %v487, 0.0
    %vm808 = vcmp.ge.f32.partialorder %v488, 0.0
    %vm809 = vcmp.ge.f32.partialorder %v489, 0.0
    %vm810 = vcmp.ge.f32.partialorder %v490, 0.0
    %v811 = vsub.f32 0.0, %v779
    %v812 = vsub.f32 0.0, %v780
    %v813 = vsub.f32 0.0, %v781
    %v814 = vsub.f32 0.0, %v782
    %v815 = vsub.f32 0.0, %v783
    %v816 = vsub.f32 0.0, %v784
    %v817 = vsub.f32 0.0, %v785
    %v818 = vsub.f32 0.0, %v786
    %v819 = vsub.f32 0.0, %v787
    %v820 = vsub.f32 0.0, %v788
    %v821 = vsub.f32 0.0, %v789
    %v822 = vsub.f32 0.0, %v790
    %v823 = vsub.f32 0.0, %v791
    %v824 = vsub.f32 0.0, %v792
    %v825 = vsub.f32 0.0, %v793
    %v826 = vsub.f32 0.0, %v794
    %v827 = vsel %vm795, %v779, %v811
    %v828 = vsel %vm796, %v780, %v812
    %v829 = vsel %vm797, %v781, %v813
    %v830 = vsel %vm798, %v782, %v814
    %v831 = vsel %vm799, %v783, %v815
    %v832 = vsel %vm800, %v784, %v816
    %v833 = vsel %vm801, %v785, %v817
    %v834 = vsel %vm802, %v786, %v818
    %v835 = vsel %vm803, %v787, %v819
    %v836 = vsel %vm804, %v788, %v820
    %v837 = vsel %vm805, %v789, %v821
    %v838 = vsel %vm806, %v790, %v822
    %v839 = vsel %vm807, %v791, %v823
    %v840 = vsel %vm808, %v792, %v824
    %v841 = vsel %vm809, %v793, %v825
    %v842 = vsel %vm810, %v794, %v826
    %v843 = vmul.f32 %v459, 0.5
    %v844 = vmul.f32 %v460, 0.5
    %v845 = vmul.f32 %v461, 0.5
    %v846 = vmul.f32 %v462, 0.5
    %v847 = vmul.f32 %v463, 0.5
    %v848 = vmul.f32 %v464, 0.5
    %v849 = vmul.f32 %v465, 0.5
    %v850 = vmul.f32 %v466, 0.5
    %v851 = vmul.f32 %v467, 0.5
    %v852 = vmul.f32 %v468, 0.5
    %v853 = vmul.f32 %v469, 0.5
    %v854 = vmul.f32 %v470, 0.5
    %v855 = vmul.f32 %v471, 0.5
    %v856 = vmul.f32 %v472, 0.5
    %v857 = vmul.f32 %v473, 0.5
    %v858 = vmul.f32 %v474, 0.5
    %v859 = vadd.f32 %v827, 1.0
    %v860 = vadd.f32 %v828, 1.0
    %v861 = vadd.f32 %v829, 1.0
    %v862 = vadd.f32 %v830, 1.0
    %v863 = vadd.f32 %v831, 1.0
    %v864 = vadd.f32 %v832, 1.0
    %v865 = vadd.f32 %v833, 1.0
    %v866 = vadd.f32 %v834, 1.0
    %v867 = vadd.f32 %v835, 1.0
    %v868 = vadd.f32 %v836, 1.0
    %v869 = vadd.f32 %v837, 1.0
    %v870 = vadd.f32 %v838, 1.0
    %v871 = vadd.f32 %v839, 1.0
    %v872 = vadd.f32 %v840, 1.0
    %v873 = vadd.f32 %v841, 1.0
    %v874 = vadd.f32 %v842, 1.0
    %v875 = vmul.f32 %v843, %v859
    %v876 = vmul.f32 %v844, %v860
    %v877 = vmul.f32 %v845, %v861
    %v878 = vmul.f32 %v846, %v862
    %v879 = vmul.f32 %v847, %v863
    %v880 = vmul.f32 %v848, %v864
    %v881 = vmul.f32 %v849, %v865
    %v882 = vmul.f32 %v850, %v866
    %v883 = vmul.f32 %v851, %v867
    %v884 = vmul.f32 %v852, %v868
    %v885 = vmul.f32 %v853, %v869
    %v886 = vmul.f32 %v854, %v870
    %v887 = vmul.f32 %v855, %v871
    %v888 = vmul.f32 %v856, %v872
    %v889 = vmul.f32 %v857, %v873
    %v890 = vmul.f32 %v858, %v874
    %v891 = vpack.c.bf16 %v879, %v875
    %v892 = vpack.c.bf16 %v880, %v876
    %v893 = vpack.c.bf16 %v881, %v877
    %v894 = vpack.c.bf16 %v882, %v878
    %v895 = vpack.c.bf16 %v887, %v883
    %v896 = vpack.c.bf16 %v888, %v884
    %v897 = vpack.c.bf16 %v889, %v885
    %v898 = vpack.c.bf16 %v890, %v886
    %v907 = vunpack.c.l.b16 %v891
    %v908 = vunpack.c.l.b16 %v892
    %v909 = vunpack.c.l.b16 %v893
    %v910 = vunpack.c.l.b16 %v894
    %v911 = vunpack.c.h.b16 %v891
    %v912 = vunpack.c.h.b16 %v892
    %v913 = vunpack.c.h.b16 %v893
    %v914 = vunpack.c.h.b16 %v894
    %v915 = vunpack.c.l.b16 %v895
    %v916 = vunpack.c.l.b16 %v896
    %v917 = vunpack.c.l.b16 %v897
    %v918 = vunpack.c.l.b16 %v898
    %v919 = vunpack.c.h.b16 %v895
    %v920 = vunpack.c.h.b16 %v896
    %v921 = vunpack.c.h.b16 %v897
    %v922 = vunpack.c.h.b16 %v898
    %v923 = vpack.c.b16 %v908, %v907
    %v924 = vpack.c.b16 %v910, %v909
    %v925 = vpack.c.b16 %v912, %v911
    %v926 = vpack.c.b16 %v914, %v913
    %v927 = vpack.c.b16 %v916, %v915
    %v928 = vpack.c.b16 %v918, %v917
    %v929 = vpack.c.b16 %v920, %v919
    %v930 = vpack.c.b16 %v922, %v921
    %939 = vst [vmem:[#allocation2] sm:$0xff] %v923
    %940 = vst [vmem:[#allocation2 + $0x8] sm:$0xff] %v924
    %941 = vst [vmem:[#allocation2 + $0x10] sm:$0xff] %v925
    %942 = vst [vmem:[#allocation2 + $0x18] sm:$0xff] %v926
    %943 = vst [vmem:[#allocation2 + $0x20] sm:$0xff] %v927
    %944 = vst [vmem:[#allocation2 + $0x28] sm:$0xff] %v928
    %945 = vst [vmem:[#allocation2 + $0x30] sm:$0xff] %v929
    %946 = vst [vmem:[#allocation2 + $0x38] sm:$0xff] %v930
    // Predicated region
    $region22: #{tpu_custom_call.1} parent=1 // pred_check
      _
    $region23: #{tpu_custom_call.1} parent=1 // pred_check_branch
      %948 = sbr.rel (0) target = $region25
    $region24: #{tpu_custom_call.1} parent=1 // pred_region
      %s950 = ssub.s32 1024, 1024
      %951 = vsyncadd [#allocation3], %s950
      %s952 = sshll.u32 [#allocation2], 4
      %s953 = int_to_ptr.vmem [resolvable:$true] %s952
      %958 = dma.vmem_to_hbm [thread:$0]  %s953, 1024, %s5, [#allocation3], 256, 256, 16
    $region25: #{tpu_custom_call.1} parent=1 // pred_fallthru
      _
    // Predicated region
    $region26: #{tpu_custom_call.1} parent=1 // pred_check
      _
    $region27: #{tpu_custom_call.1} parent=1 // pred_check_branch
      %960 = sbr.rel (0) target = $region29
    $region28: #{tpu_custom_call.1} parent=1 // pred_region
      %961 = dma.done [#allocation3], 1024
    $region29: #{tpu_custom_call.1} parent=1 // pred_fallthru
      _
    %962 = vsyncpa [#allocation3], 1

</llo_original>
